<compile_context>
chip_gen: v5e
topology: v5e:2x2
jax: 0.10.0
libtpu: 0.0.40
codegen_flags: <defaults>
</compile_context>

<pallas_src>
import jax
import jax.numpy as jnp
from jax import lax
from jax.experimental import pallas as pl
from jax.experimental.pallas import tpu as pltpu

MARGIN = 0.3
_NEG_BIG = -1e30
_POS_BIG = 1e30


def _round_up(v, m):
    return (v + m - 1) // m * m


def _vmem_budget_bytes():
    """(physical VMEM capacity, usable budget) per TensorCore, with Mosaic headroom."""
    cap = 64 << 20  # conservative default: v7x physical VMEM per TC
    try:
        info = pltpu.get_tpu_info()
        cap = int(getattr(info, "vmem_capacity_bytes", cap) or cap)
    except Exception:
        pass
    budget = max(cap - (8 << 20), 24 << 20)  # leave room for internal scratch/semaphores
    return cap, budget


def _pad_inputs(x, t, n, d, n_pad, d_pad):
    """Zero-pad features, sentinel-pad labels, build the row/column norm vectors."""
    x_p = jnp.zeros((n_pad, d_pad), jnp.float32).at[:n, :d].set(x)
    sentinel = jnp.iinfo(jnp.int32).min           # never collides with real labels
    t_col = jnp.full((n_pad, 1), sentinel, jnp.int32).at[:n, 0].set(t)
    t_row = t_col.reshape(1, n_pad)
    sq = jnp.sum(x_p * x_p, axis=1)               # padded rows -> 0
    valid = jnp.arange(n_pad) < n
    sq_row = jnp.where(valid, sq, _POS_BIG).reshape(1, n_pad)  # pad cols never win the min
    sq_col = sq.reshape(n_pad, 1)
    return x_p, sq_row, sq_col, t_col, t_row


# ----------------------------------------------------------------------------
# Kernel A: full feature matrix resident in VMEM, row-parallel mining.
# ----------------------------------------------------------------------------
def _mine_resident_kernel(xall_ref, sqrow_ref, sqcol_ref, tcol_ref, trow_ref, out_ref):
    tile_m = sqcol_ref.shape[0]
    row0 = pl.multiple_of(pl.program_id(0) * tile_m, 8)
    xq = xall_ref[pl.ds(row0, tile_m), :]                        # (tile_m, d_pad)

    # <x_i, x_j> on the MXU, contracting the feature dim of both operands
    # (QK^T layout; no explicit transpose of the resident matrix).
    gram = lax.dot_general(xq, xall_ref[...],
                           dimension_numbers=(((1,), (1,)), ((), ())),
                           preferred_element_type=jnp.float32)   # (tile_m, n_pad)

    # Mine on m_ij = ||x_j||^2 - 2<x_i,x_j>; the per-row constant ||x_i||^2 cannot
    # change the arg-max/min and is added back to the mined values only.
    m = sqrow_ref[...] - 2.0 * gram
    same = tcol_ref[...] == trow_ref[...]
    pos = jnp.where(same, m, _NEG_BIG)       # pad cols: sentinel label => not "same"
    neg = jnp.where(same, _POS_BIG, m)       # pad cols: m == +1e30 via sq_row padding

    ap2 = sqcol_ref[...] + jnp.max(pos, axis=1, keepdims=True)
    an2 = sqcol_ref[...] + jnp.min(neg, axis=1, keepdims=True)
    out_ref[:, 0:1] = jnp.sqrt(jnp.maximum(ap2, 1e-12))
    out_ref[:, 1:2] = jnp.sqrt(jnp.maximum(an2, 1e-12))


# ----------------------------------------------------------------------------
# Kernel B: column-tiled online hard mining (bounded VMEM for large batches).
# ----------------------------------------------------------------------------
def _mine_tiled_kernel(xq_ref, xk_ref, sqrow_ref, sqcol_ref, tcol_ref, trow_ref,
                       out_ref, ap_sc, an_sc):
    k = pl.program_id(1)

    @pl.when(k == 0)
    def _():
        ap_sc[...] = jnp.full_like(ap_sc, _NEG_BIG)
        an_sc[...] = jnp.full_like(an_sc, _POS_BIG)

    gram = lax.dot_general(xq_ref[...], xk_ref[...],
                           dimension_numbers=(((1,), (1,)), ((), ())),
                           preferred_element_type=jnp.float32)   # (tile_m, tile_n)
    m = sqrow_ref[...] - 2.0 * gram
    same = tcol_ref[...] == trow_ref[...]
    ap_sc[...] = jnp.maximum(
        ap_sc[...], jnp.max(jnp.where(same, m, _NEG_BIG), axis=1, keepdims=True))
    an_sc[...] = jnp.minimum(
        an_sc[...], jnp.min(jnp.where(same, _POS_BIG, m), axis=1, keepdims=True))

    @pl.when(k == pl.num_programs(1) - 1)
    def _():
        sq_q = sqcol_ref[...]
        out_ref[:, 0:1] = jnp.sqrt(jnp.maximum(sq_q + ap_sc[...], 1e-12))
        out_ref[:, 1:2] = jnp.sqrt(jnp.maximum(sq_q + an_sc[...], 1e-12))


# ----------------------------------------------------------------------------
# Wrappers
# ----------------------------------------------------------------------------
def _est_resident(n_pad, d_pad, tile_m, resident_bufs):
    return (resident_bufs * n_pad * d_pad * 4     # resident features
            + tile_m * d_pad * 4                  # in-kernel query slice
            + 6 * tile_m * n_pad * 4              # gram / mask / pos / neg temporaries
            + 4 * tile_m * 128 * 4                # (tile_m, 1) column blocks (lane padded)
            + 8 * n_pad * 4                       # (1, n_pad) rows
            + (2 << 20))                          # slack


def _mine_resident(x, t, n, d, n8, d_pad, cap, budget):
    # Row tile: multiple of 8; >= 2 grid steps when possible (v7x has 2 TensorCores),
    # smaller tiles for large batches to bound (tile_m, n_pad) temporaries / spills.
    if n8 <= 512:
        tile_m = _round_up(max(n8 // 2, 8), 8)
    elif n8 <= 2048:
        tile_m = 256
    else:
        tile_m = 128
    while True:
        n_pad = _round_up(n8, tile_m)
        if _est_resident(n_pad, d_pad, tile_m, 1) <= budget or tile_m <= 8:
            break
        tile_m = max(8, tile_m // 2)

    x_p, sq_row, sq_col, t_col, t_row = _pad_inputs(x, t, n, d, n_pad, d_pad)
    grid = (n_pad // tile_m,)

    def build(single_buffer):
        res_kwargs = {"pipeline_mode": pl.Buffered(1)} if single_buffer else {}
        est = _est_resident(n_pad, d_pad, tile_m, 1 if single_buffer else 2)
        vmem_limit = int(min(cap, max(est, 16 << 20)))
        return pl.pallas_call(
            _mine_resident_kernel,
            out_shape=jax.ShapeDtypeStruct((n_pad, 2), jnp.float32),
            grid=grid,
            in_specs=[
                pl.BlockSpec((n_pad, d_pad), lambda i: (0, 0), **res_kwargs),  # features (resident)
                pl.BlockSpec((1, n_pad), lambda i: (0, 0), **res_kwargs),      # ||x_j||^2 row
                pl.BlockSpec((tile_m, 1), lambda i: (i, 0)),                   # ||x_i||^2 tile
                pl.BlockSpec((tile_m, 1), lambda i: (i, 0)),                   # labels (column tile)
                pl.BlockSpec((1, n_pad), lambda i: (0, 0), **res_kwargs),      # labels (row)
            ],
            out_specs=pl.BlockSpec((tile_m, 2), lambda i: (i, 0)),
            compiler_params=pltpu.CompilerParams(
                dimension_semantics=("parallel",),
                vmem_limit_bytes=vmem_limit),
        )

    try:
        out = build(True)(x_p, sq_row, sq_col, t_col, t_row)
    except Exception:
        # pipeline_mode=Buffered(1) not supported by this JAX build: fall back to
        # default (double-buffered) specs — correct, just uses more VMEM.
        out = build(False)(x_p, sq_row, sq_col, t_col, t_row)
    return out


def _est_tiled(d_pad, tile_m, tile_n):
    return (2 * tile_m * d_pad * 4        # query row tile (double-buffered)
            + 2 * tile_n * d_pad * 4      # key row tile (double-buffered, streamed)
            + 5 * tile_m * tile_n * 4     # gram / mask / pos / neg temporaries
            + 6 * tile_m * 128 * 4        # (tile_m, 1) blocks + running max/min scratch
            + 8 * tile_n * 4
            + (2 << 20))


def _mine_column_tiled(x, t, n, d, n8, d_pad, cap, budget):
    tile_m, tile_n = 256, 512
    while True:
        est = _est_tiled(d_pad, tile_m, tile_n)
        if est <= budget:
            break
        if tile_n > 128:
            tile_n //= 2
        elif tile_m > 128:
            tile_m //= 2
        else:
            break                          # smallest tiles; request what we need
    n_pad = _round_up(n8, max(tile_m, tile_n))
    vmem_limit = int(min(cap, max(est, 16 << 20)))

    x_p, sq_row, sq_col, t_col, t_row = _pad_inputs(x, t, n, d, n_pad, d_pad)
    grid = (n_pad // tile_m, n_pad // tile_n)

    return pl.pallas_call(
        _mine_tiled_kernel,
        out_shape=jax.ShapeDtypeStruct((n_pad, 2), jnp.float32),
        grid=grid,
        in_specs=[
            pl.BlockSpec((tile_m, d_pad), lambda i, k: (i, 0)),   # query rows
            pl.BlockSpec((tile_n, d_pad), lambda i, k: (k, 0)),   # key rows (streamed)
            pl.BlockSpec((1, tile_n), lambda i, k: (0, k)),       # ||x_j||^2 row block
            pl.BlockSpec((tile_m, 1), lambda i, k: (i, 0)),       # ||x_i||^2 column block
            pl.BlockSpec((tile_m, 1), lambda i, k: (i, 0)),       # labels (column)
            pl.BlockSpec((1, tile_n), lambda i, k: (0, k)),       # labels (row block)
        ],
        out_specs=pl.BlockSpec((tile_m, 2), lambda i, k: (i, 0)),
        scratch_shapes=[pltpu.VMEM((tile_m, 1), jnp.float32),     # running max over positives
                        pltpu.VMEM((tile_m, 1), jnp.float32)],    # running min over negatives
        compiler_params=pltpu.CompilerParams(
            dimension_semantics=("parallel", "arbitrary"),
            vmem_limit_bytes=vmem_limit),
    )(x_p, x_p, sq_row, sq_col, t_col, t_row)


def ori_triplet_loss(inputs, targets, margin=MARGIN, *, force_column_tiling=False):
    """inputs: (n, feat_dim) float; targets: (n,) int labels.  Returns (loss, correct)."""
    n, d = inputs.shape
    x = inputs.astype(jnp.float32)
    t = targets.astype(jnp.int32)
    d_pad = _round_up(d, 128)
    n8 = _round_up(n, 8)
    cap, budget = _vmem_budget_bytes()

    # Resident path keeps the full (n_pad, d_pad) feature matrix in VMEM (single
    # buffered); switch to column-tiled online mining once that would take more
    # than ~1/3 of the usable VMEM budget (mandatory on v7x for large n*d).
    if force_column_tiling or n8 * d_pad * 4 > budget // 3:
        out = _mine_column_tiled(x, t, n, d, n8, d_pad, cap, budget)
    else:
        out = _mine_resident(x, t, n, d, n8, d_pad, cap, budget)

    ap = out[:n, 0]
    an = out[:n, 1]
    # MarginRankingLoss(margin)(dist_an, dist_ap, y=1) = mean(max(0, ap - an + margin))
    loss = jnp.mean(jnp.maximum(ap - an + margin, 0.0))
    correct = jnp.sum((an >= ap).astype(jnp.int32))
    return loss, correct


def _reference_loss(x, targets, margin=MARGIN):
    """Pure-JAX reference mirroring the PyTorch forward."""
    sq = jnp.sum(x * x, axis=1, keepdims=True)
    gram = jnp.dot(x, x.T, precision=lax.Precision.HIGHEST)
    dist = jnp.sqrt(jnp.maximum(sq + sq.T - 2.0 * gram, 1e-12))
    mask = targets[:, None] == targets[None, :]
    dist_ap = jnp.max(jnp.where(mask, dist, -jnp.inf), axis=1)
    dist_an = jnp.min(jnp.where(mask, jnp.inf, dist), axis=1)
    return jnp.mean(jnp.maximum(dist_ap - dist_an + margin, 0.0))


if __name__ == "__main__":
    key = jax.random.PRNGKey(0)

    # 1) Small PK-sampled re-ID batch -> resident (single-buffered) path.
    n, feat_dim = 8, 32
    x = jax.random.normal(key, (n, feat_dim), dtype=jnp.float32)
    targets = jnp.array([0, 0, 1, 1, 2, 2, 3, 3], dtype=jnp.int32)  # 4 ids x 2 samples
    loss, correct = ori_triplet_loss(x, targets)
    jax.block_until_ready((loss, correct))
    loss_ref = _reference_loss(x, targets)
    assert jnp.isfinite(loss), loss
    assert jnp.allclose(loss, loss_ref, rtol=2e-2, atol=2e-2), (loss, loss_ref)
    assert 0 <= int(correct) <= n, correct

    # 2) Larger batch forced through the column-tiled online-mining path
    #    (exercises multi-step mining plus padded rows / padded columns).
    kx, kt = jax.random.split(key)
    n2, feat2 = 600, 96
    x2 = jax.random.normal(kx, (n2, feat2), dtype=jnp.float32)
    t2 = jax.random.randint(kt, (n2,), 0, 37, dtype=jnp.int32)
    loss2, correct2 = ori_triplet_loss(x2, t2, force_column_tiling=True)
    jax.block_until_ready((loss2, correct2))
    loss2_ref = _reference_loss(x2, t2)
    assert jnp.isfinite(loss2), loss2
    assert jnp.allclose(loss2, loss2_ref, rtol=2e-2, atol=2e-2), (loss2, loss2_ref)
    assert 0 <= int(correct2) <= n2, correct2

    print("KERNEL_OK")
</pallas_src>

<mosaic_0001>
module attributes {stable_mosaic.version = 11 : i64} {
  func.func @_mine_resident_kernel(%arg0: i32, %arg1: memref<8x128xf32, #tpu.memory_space<vmem>>, %arg2: memref<1x8xf32, #tpu.memory_space<vmem>>, %arg3: memref<8x1xf32, #tpu.memory_space<vmem>>, %arg4: memref<8x1xi32, #tpu.memory_space<vmem>>, %arg5: memref<1x8xi32, #tpu.memory_space<vmem>>, %arg6: memref<8x2xf32, #tpu.memory_space<vmem>>) attributes {dimension_semantics = [#tpu.dimension_semantics<parallel>], iteration_bounds = array<i64: 1>, scalar_prefetch = 0 : i64, scratch_operands = 0 : i64, tpu.core_type = #tpu.core_type<tc>, window_params = [{pipeline_mode = #tpu.pipeline_mode<synchronous>, transform_indices = @transform_0, window_bounds = array<i64: 8, 128>}, {pipeline_mode = #tpu.pipeline_mode<synchronous>, transform_indices = @transform_1, window_bounds = array<i64: 1, 8>}, {transform_indices = @transform_2, window_bounds = array<i64: 8, 1>}, {transform_indices = @transform_3, window_bounds = array<i64: 8, 1>}, {pipeline_mode = #tpu.pipeline_mode<synchronous>, transform_indices = @transform_4, window_bounds = array<i64: 1, 8>}, {transform_indices = @transform_5, window_bounds = array<i64: 8, 2>}]} {
    %c8_i32 = arith.constant 8 : i32
    %0 = arith.muli %arg0, %c8_i32 : i32
    %1 = tpu.assume_multiple %0, 8 : i32
    %2 = arith.index_cast %1 : i32 to index
    %c0 = arith.constant 0 : index
    %3 = vector.load %arg1[%2, %c0] : memref<8x128xf32, #tpu.memory_space<vmem>>, vector<8x128xf32>
    %c0_0 = arith.constant 0 : index
    %c0_1 = arith.constant 0 : index
    %4 = vector.load %arg1[%c0_0, %c0_1] : memref<8x128xf32, #tpu.memory_space<vmem>>, vector<8x128xf32>
    %cst = arith.constant dense<0.000000e+00> : vector<8x8xf32>
    %5 = tpu.matmul %3, %4, %cst {dimension_numbers = #tpu.dot_dimension_numbers<[1], [1], [0], [0], [0, 0, 1, 0], [], []>} : vector<8x128xf32>, vector<8x128xf32>, vector<8x8xf32> -> vector<8x8xf32>
    %c0_2 = arith.constant 0 : index
    %c0_3 = arith.constant 0 : index
    %6 = vector.load %arg2[%c0_2, %c0_3] : memref<1x8xf32, #tpu.memory_space<vmem>>, vector<1x8xf32>
    %cst_4 = arith.constant 2.000000e+00 : f32
    %7 = vector.broadcast %cst_4 : f32 to vector<8x8xf32>
    %8 = arith.mulf %7, %5 : vector<8x8xf32>
    %9 = vector.broadcast %6 : vector<1x8xf32> to vector<8x8xf32>
    %10 = arith.subf %9, %8 : vector<8x8xf32>
    %c0_5 = arith.constant 0 : index
    %c0_6 = arith.constant 0 : index
    %11 = vector.load %arg4[%c0_5, %c0_6] : memref<8x1xi32, #tpu.memory_space<vmem>>, vector<8x1xi32>
    %c0_7 = arith.constant 0 : index
    %c0_8 = arith.constant 0 : index
    %12 = vector.load %arg5[%c0_7, %c0_8] : memref<1x8xi32, #tpu.memory_space<vmem>>, vector<1x8xi32>
    %13 = vector.broadcast %11 : vector<8x1xi32> to vector<8x8xi32>
    %14 = vector.broadcast %12 : vector<1x8xi32> to vector<8x8xi32>
    %15 = arith.cmpi eq, %13, %14 : vector<8x8xi32>
    %cst_9 = arith.constant -1.000000e+30 : f32
    %16 = vector.broadcast %cst_9 : f32 to vector<8x8xf32>
    %17 = arith.select %15, %10, %16 : vector<8x8xi1>, vector<8x8xf32>
    %cst_10 = arith.constant 1.000000e+30 : f32
    %18 = vector.broadcast %cst_10 : f32 to vector<8x8xf32>
    %19 = arith.select %15, %18, %10 : vector<8x8xi1>, vector<8x8xf32>
    %c0_11 = arith.constant 0 : index
    %c0_12 = arith.constant 0 : index
    %20 = vector.load %arg3[%c0_11, %c0_12] : memref<8x1xf32, #tpu.memory_space<vmem>>, vector<8x1xf32>
    %cst_13 = arith.constant dense<0xFF800000> : vector<8xf32>
    %21 = vector.multi_reduction <maximumf>, %17, %cst_13 [1] : vector<8x8xf32> to vector<8xf32>
    %22 = vector.shape_cast %21 : vector<8xf32> to vector<8x1xf32>
    %23 = arith.addf %20, %22 : vector<8x1xf32>
    %c0_14 = arith.constant 0 : index
    %c0_15 = arith.constant 0 : index
    %24 = vector.load %arg3[%c0_14, %c0_15] : memref<8x1xf32, #tpu.memory_space<vmem>>, vector<8x1xf32>
    %cst_16 = arith.constant dense<0x7F800000> : vector<8xf32>
    %25 = vector.multi_reduction <minimumf>, %19, %cst_16 [1] : vector<8x8xf32> to vector<8xf32>
    %26 = vector.shape_cast %25 : vector<8xf32> to vector<8x1xf32>
    %27 = arith.addf %24, %26 : vector<8x1xf32>
    %cst_17 = arith.constant 9.99999996E-13 : f32
    %28 = vector.broadcast %cst_17 : f32 to vector<8x1xf32>
    %29 = arith.maximumf %23, %28 : vector<8x1xf32>
    %30 = math.sqrt %29 : vector<8x1xf32>
    %c0_18 = arith.constant 0 : index
    %c0_19 = arith.constant 0 : index
    %31 = vector.load %arg6[%c0_18, %c0_19] : memref<8x2xf32, #tpu.memory_space<vmem>>, vector<8x1xf32>
    tpu.vector_store %arg6[%c0_18, %c0_19], %30 {strides = array<i32>} : memref<8x2xf32, #tpu.memory_space<vmem>>, vector<8x1xf32>,
    %cst_20 = arith.constant 9.99999996E-13 : f32
    %32 = vector.broadcast %cst_20 : f32 to vector<8x1xf32>
    %33 = arith.maximumf %27, %32 : vector<8x1xf32>
    %34 = math.sqrt %33 : vector<8x1xf32>
    %c0_21 = arith.constant 0 : index
    %c1 = arith.constant 1 : index
    %35 = vector.load %arg6[%c0_21, %c1] : memref<8x2xf32, #tpu.memory_space<vmem>>, vector<8x1xf32>
    tpu.vector_store %arg6[%c0_21, %c1], %34 {strides = array<i32>} : memref<8x2xf32, #tpu.memory_space<vmem>>, vector<8x1xf32>,
    return
  }
  func.func @transform_0(%arg0: i32) -> (i32, i32) {
    %c0_i32 = arith.constant 0 : i32
    %c0_i32_0 = arith.constant 0 : i32
    %c0_i32_1 = arith.constant 0 : i32
    return %c0_i32, %c0_i32_0 : i32, i32
  }
  func.func @transform_1(%arg0: i32) -> (i32, i32) {
    %c0_i32 = arith.constant 0 : i32
    %c0_i32_0 = arith.constant 0 : i32
    %c0_i32_1 = arith.constant 0 : i32
    return %c0_i32, %c0_i32_0 : i32, i32
  }
  func.func @transform_2(%arg0: i32) -> (i32, i32) {
    %c0_i32 = arith.constant 0 : i32
    %c0_i32_0 = arith.constant 0 : i32
    return %arg0, %c0_i32 : i32, i32
  }
  func.func @transform_3(%arg0: i32) -> (i32, i32) {
    %c0_i32 = arith.constant 0 : i32
    %c0_i32_0 = arith.constant 0 : i32
    return %arg0, %c0_i32 : i32, i32
  }
  func.func @transform_4(%arg0: i32) -> (i32, i32) {
    %c0_i32 = arith.constant 0 : i32
    %c0_i32_0 = arith.constant 0 : i32
    %c0_i32_1 = arith.constant 0 : i32
    return %c0_i32, %c0_i32_0 : i32, i32
  }
  func.func @transform_5(%arg0: i32) -> (i32, i32) {
    %c0_i32 = arith.constant 0 : i32
    %c0_i32_0 = arith.constant 0 : i32
    return %arg0, %c0_i32 : i32, i32
  }
}

module attributes {stable_mosaic.version = 11 : i64} {
  func.func @_mine_resident_kernel(%arg0: i32, %arg1: memref<8x128xf32, #tpu.memory_space<vmem>>, %arg2: memref<1x8xf32, #tpu.memory_space<vmem>>, %arg3: memref<8x1xf32, #tpu.memory_space<vmem>>, %arg4: memref<8x1xi32, #tpu.memory_space<vmem>>, %arg5: memref<1x8xi32, #tpu.memory_space<vmem>>, %arg6: memref<8x2xf32, #tpu.memory_space<vmem>>) attributes {dimension_semantics = [#tpu.dimension_semantics<parallel>], iteration_bounds = array<i64: 1>, scalar_prefetch = 0 : i64, scratch_operands = 0 : i64, tpu.core_type = #tpu.core_type<tc>, window_params = [{pipeline_mode = #tpu.pipeline_mode<synchronous>, transform_indices = @transform_0, window_bounds = array<i64: 8, 128>}, {pipeline_mode = #tpu.pipeline_mode<synchronous>, transform_indices = @transform_1, window_bounds = array<i64: 1, 8>}, {transform_indices = @transform_2, window_bounds = array<i64: 8, 1>}, {transform_indices = @transform_3, window_bounds = array<i64: 8, 1>}, {pipeline_mode = #tpu.pipeline_mode<synchronous>, transform_indices = @transform_4, window_bounds = array<i64: 1, 8>}, {transform_indices = @transform_5, window_bounds = array<i64: 8, 2>}]} {
    %c8_i32 = arith.constant 8 : i32
    %0 = arith.muli %arg0, %c8_i32 : i32
    %1 = tpu.assume_multiple %0, 8 : i32
    %2 = arith.index_cast %1 : i32 to index
    %c0 = arith.constant 0 : index
    %3 = vector.load %arg1[%2, %c0] : memref<8x128xf32, #tpu.memory_space<vmem>>, vector<8x128xf32>
    %c0_0 = arith.constant 0 : index
    %c0_1 = arith.constant 0 : index
    %4 = vector.load %arg1[%c0_0, %c0_1] : memref<8x128xf32, #tpu.memory_space<vmem>>, vector<8x128xf32>
    %cst = arith.constant dense<0.000000e+00> : vector<8x8xf32>
    %5 = tpu.matmul %3, %4, %cst {dimension_numbers = #tpu.dot_dimension_numbers<[1], [1], [0], [0], [0, 0, 1, 0], [], []>} : vector<8x128xf32>, vector<8x128xf32>, vector<8x8xf32> -> vector<8x8xf32>
    %c0_2 = arith.constant 0 : index
    %c0_3 = arith.constant 0 : index
    %6 = vector.load %arg2[%c0_2, %c0_3] : memref<1x8xf32, #tpu.memory_space<vmem>>, vector<1x8xf32>
    %cst_4 = arith.constant 2.000000e+00 : f32
    %7 = vector.broadcast %cst_4 : f32 to vector<8x8xf32>
    %8 = arith.mulf %7, %5 : vector<8x8xf32>
    %9 = vector.broadcast %6 : vector<1x8xf32> to vector<8x8xf32>
    %10 = arith.subf %9, %8 : vector<8x8xf32>
    %c0_5 = arith.constant 0 : index
    %c0_6 = arith.constant 0 : index
    %11 = vector.load %arg4[%c0_5, %c0_6] : memref<8x1xi32, #tpu.memory_space<vmem>>, vector<8x1xi32>
    %c0_7 = arith.constant 0 : index
    %c0_8 = arith.constant 0 : index
    %12 = vector.load %arg5[%c0_7, %c0_8] : memref<1x8xi32, #tpu.memory_space<vmem>>, vector<1x8xi32>
    %13 = vector.broadcast %11 : vector<8x1xi32> to vector<8x8xi32>
    %14 = vector.broadcast %12 : vector<1x8xi32> to vector<8x8xi32>
    %15 = arith.cmpi eq, %13, %14 : vector<8x8xi32>
    %cst_9 = arith.constant -1.000000e+30 : f32
    %16 = vector.broadcast %cst_9 : f32 to vector<8x8xf32>
    %17 = arith.select %15, %10, %16 : vector<8x8xi1>, vector<8x8xf32>
    %cst_10 = arith.constant 1.000000e+30 : f32
    %18 = vector.broadcast %cst_10 : f32 to vector<8x8xf32>
    %19 = arith.select %15, %18, %10 : vector<8x8xi1>, vector<8x8xf32>
    %c0_11 = arith.constant 0 : index
    %c0_12 = arith.constant 0 : index
    %20 = vector.load %arg3[%c0_11, %c0_12] : memref<8x1xf32, #tpu.memory_space<vmem>>, vector<8x1xf32>
    %cst_13 = arith.constant dense<0xFF800000> : vector<8xf32>
    %21 = vector.multi_reduction <maximumf>, %17, %cst_13 [1] : vector<8x8xf32> to vector<8xf32>
    %22 = vector.shape_cast %21 : vector<8xf32> to vector<8x1xf32>
    %23 = arith.addf %20, %22 : vector<8x1xf32>
    %c0_14 = arith.constant 0 : index
    %c0_15 = arith.constant 0 : index
    %24 = vector.load %arg3[%c0_14, %c0_15] : memref<8x1xf32, #tpu.memory_space<vmem>>, vector<8x1xf32>
    %cst_16 = arith.constant dense<0x7F800000> : vector<8xf32>
    %25 = vector.multi_reduction <minimumf>, %19, %cst_16 [1] : vector<8x8xf32> to vector<8xf32>
    %26 = vector.shape_cast %25 : vector<8xf32> to vector<8x1xf32>
    %27 = arith.addf %24, %26 : vector<8x1xf32>
    %cst_17 = arith.constant 9.99999996E-13 : f32
    %28 = vector.broadcast %cst_17 : f32 to vector<8x1xf32>
    %29 = arith.maximumf %23, %28 : vector<8x1xf32>
    %30 = math.sqrt %29 : vector<8x1xf32>
    %c0_18 = arith.constant 0 : index
    %c0_19 = arith.constant 0 : index
    %31 = vector.load %arg6[%c0_18, %c0_19] : memref<8x2xf32, #tpu.memory_space<vmem>>, vector<8x1xf32>
    tpu.vector_store %arg6[%c0_18, %c0_19], %30 {strides = array<i32>} : memref<8x2xf32, #tpu.memory_space<vmem>>, vector<8x1xf32>,
    %cst_20 = arith.constant 9.99999996E-13 : f32
    %32 = vector.broadcast %cst_20 : f32 to vector<8x1xf32>
    %33 = arith.maximumf %27, %32 : vector<8x1xf32>
    %34 = math.sqrt %33 : vector<8x1xf32>
    %c0_21 = arith.constant 0 : index
    %c1 = arith.constant 1 : index
    %35 = vector.load %arg6[%c0_21, %c1] : memref<8x2xf32, #tpu.memory_space<vmem>>, vector<8x1xf32>
    tpu.vector_store %arg6[%c0_21, %c1], %34 {strides = array<i32>} : memref<8x2xf32, #tpu.memory_space<vmem>>, vector<8x1xf32>,
    return
  }
  func.func @transform_0(%arg0: i32) -> (i32, i32) {
    %c0_i32 = arith.constant 0 : i32
    %c0_i32_0 = arith.constant 0 : i32
    %c0_i32_1 = arith.constant 0 : i32
    return %c0_i32, %c0_i32_0 : i32, i32
  }
  func.func @transform_1(%arg0: i32) -> (i32, i32) {
    %c0_i32 = arith.constant 0 : i32
    %c0_i32_0 = arith.constant 0 : i32
    %c0_i32_1 = arith.constant 0 : i32
    return %c0_i32, %c0_i32_0 : i32, i32
  }
  func.func @transform_2(%arg0: i32) -> (i32, i32) {
    %c0_i32 = arith.constant 0 : i32
    %c0_i32_0 = arith.constant 0 : i32
    return %arg0, %c0_i32 : i32, i32
  }
  func.func @transform_3(%arg0: i32) -> (i32, i32) {
    %c0_i32 = arith.constant 0 : i32
    %c0_i32_0 = arith.constant 0 : i32
    return %arg0, %c0_i32 : i32, i32
  }
  func.func @transform_4(%arg0: i32) -> (i32, i32) {
    %c0_i32 = arith.constant 0 : i32
    %c0_i32_0 = arith.constant 0 : i32
    %c0_i32_1 = arith.constant 0 : i32
    return %c0_i32, %c0_i32_0 : i32, i32
  }
  func.func @transform_5(%arg0: i32) -> (i32, i32) {
    %c0_i32 = arith.constant 0 : i32
    %c0_i32_0 = arith.constant 0 : i32
    return %arg0, %c0_i32 : i32, i32
  }
}

</mosaic_0001>

<llo_original>
// kernel: tpu_custom_call.1
$region0: #{tpu_custom_call.1}
  #allocation0 [shape = 'u32[]', space=smem, size = 0x4, offset = 0x4, fixed_abs, tag = 'smem constant byte address 0x4 - core index']
  #allocation1 [shape = 'u32[72,128]{1,0:T(1,128)}', space=vmem, size = 0x9000, scoped, tag = 'internal scratch']
  %s0 = inlined_call_operand.vmem [shape: f32[8,128], index: 0, kind: input, shape index: {}]
  %s1 = inlined_call_operand.vmem [shape: f32[1,8], index: 1, kind: input, shape index: {}]
  %s2 = inlined_call_operand.vmem [shape: f32[8,1], index: 2, kind: input, shape index: {}]
  %s3 = inlined_call_operand.vmem [shape: s32[8,1], index: 3, kind: input, shape index: {}]
  %s4 = inlined_call_operand.vmem [shape: s32[1,8], index: 4, kind: input, shape index: {}]
  %s5 = inlined_call_operand.vmem [shape: f32[8,2], index: 5, kind: output, shape index: {}]
  %s6 = sld [smem:[#allocation0]]
  $region30: #{tpu_custom_call.1} parent=0
    _
  %s8 = ssub.s32 1, %s6
  %s9 = scalar_select 0, %s8, %s6
  // Predicated region
  $region2: #{tpu_custom_call.1} parent=0 // pred_check
    _
  $region3: #{tpu_custom_call.1} parent=0 // pred_check_branch
    %11 = sbr.rel (0) target = $region5
  $region4: #{tpu_custom_call.1} parent=0 // pred_region
    _
  $region5: #{tpu_custom_call.1} parent=0 // pred_fallthru
    _
  // Predicated region
  $region6: #{tpu_custom_call.1} parent=0 // pred_check
    _
  $region7: #{tpu_custom_call.1} parent=0 // pred_check_branch
    %13 = sbr.rel (0) target = $region9
  $region8: #{tpu_custom_call.1} parent=0 // pred_region
    _
  $region9: #{tpu_custom_call.1} parent=0 // pred_fallthru
    _
  // Predicated region
  $region10: #{tpu_custom_call.1} parent=0 // pred_check
    _
  $region11: #{tpu_custom_call.1} parent=0 // pred_check_branch
    %15 = sbr.rel (0) target = $region13
  $region12: #{tpu_custom_call.1} parent=0 // pred_region
    _
  $region13: #{tpu_custom_call.1} parent=0 // pred_fallthru
    _
  // Predicated region
  $region14: #{tpu_custom_call.1} parent=0 // pred_check
    _
  $region15: #{tpu_custom_call.1} parent=0 // pred_check_branch
    %17 = sbr.rel (0) target = $region17
  $region16: #{tpu_custom_call.1} parent=0 // pred_region
    _
  $region17: #{tpu_custom_call.1} parent=0 // pred_fallthru
    _
  // Predicated region
  $region18: #{tpu_custom_call.1} parent=0 // pred_check
    _
  $region19: #{tpu_custom_call.1} parent=0 // pred_check_branch
    %19 = sbr.rel (0) target = $region21
  $region20: #{tpu_custom_call.1} parent=0 // pred_region
    _
  $region21: #{tpu_custom_call.1} parent=0 // pred_fallthru
    _
  %s20 = smul.u32 0, 8
  %s21 = scalar_lea.vmem %s0, %s20
  %v22 = vld [vmem:[%s21] sm:$0xff]
  %v23 = vld [vmem:[%s0] sm:$0xff]
  %24 = vmatpush.xpose.msra.mxu0 0.0
  %25 = vmatpush.xpose.msra.mxu0 0.0
  %26 = vmatpush.xpose.msra.mxu0 0.0
  %27 = vmatpush.xpose.msra.mxu0 0.0
  %28 = vmatpush.xpose.msra.mxu0 0.0
  %29 = vmatpush.xpose.msra.mxu0 0.0
  %30 = vmatpush.xpose.msra.mxu0 0.0
  %31 = vmatpush.xpose.msra.mxu0 0.0
  %32 = vmatpush.xpose.msra.mxu0 0.0
  %33 = vmatpush.xpose.msra.mxu0 0.0
  %34 = vmatpush.xpose.msra.mxu0 0.0
  %35 = vmatpush.xpose.msra.mxu0 0.0
  %36 = vmatpush.xpose.msra.mxu0 0.0
  %37 = vmatpush.xpose.msra.mxu0 0.0
  %38 = vmatpush.xpose.msra.mxu0 0.0
  %39 = vmatpush.xpose.msra.mxu0 %v23
  %40 = vmatmul.f32.gmra.mxu0 %v22
  %v41 = vpop.f32.mrf.mxu0
  %v42 = vadd.f32 0.0, %v41
  %43 = vdwg.mxu0
  %v44 = vld [vmem:[%s1] sm:$0x1]
  %v45 = vmul.f32 %v42, 2.0
  %v47 = vperm.slane %v44, 0
  %v49 = vsub.f32 %v47, %v45
  %v50 = vld [vmem:[%s3] sm:$0xff]
  %v51 = vld [vmem:[%s4] sm:$0x1]
  %52 = vset.pattern.permute.xlu0 0
  %53 = vperm.xlu0 %52, %v50
  %v54 = vpop.permute.xlu0 %53
  %v55 = vperm.slane %v51, 0
  %vm56 = vcmp.eq.s32.totalorder %v54, %v55
  %v57 = vsel %vm56, %v49, -1e+30
  %v58 = vsel %vm56, 1e+30, %v49
  %v59 = vld [vmem:[%s2] sm:$0xff]
  %vm60 = vcmask 64512
  %v61 = vsel %vm60, %v57, -inf
  %62 = vmax.xlane.f32.xlu0 %v61
  %v63 = vpop.xlane.xlu0 %62
  %v64 = vadd.f32 %v59, %v63
  %v65 = vsel %vm60, %v58, inf
  %66 = vmin.xlane.f32.xlu0 %v65
  %v67 = vpop.xlane.xlu0 %66
  %v68 = vadd.f32 %v59, %v67
  %v69 = vmax.f32 %v64, 1e-12
  %v70 = vrsqrt.pop %v69
  %v71 = vmul.f32 %v70, %v69
  %v72 = vmul.f32 %v71, %v70
  %v73 = vmul.f32 0.5, %v72
  %v74 = vsub.f32 1.5, %v73
  %v75 = vmul.f32 %v70, %v74
  %v76 = vmul.f32 %v69, %v75
  %vm77 = vcmp.eq.f32.partialorder %v69, inf
  %v78 = vsel %vm77, %v69, %v76
  %vm79 = vcmp.eq.f32.partialorder %v69, 0.0
  %v80 = vand.u32 %v69, 2147483648
  %v81 = vsel %vm79, %v80, %v78
  %vm82 = vcmask 7168
  %83 = vst.msk [vmem:[%s5] sm:$0xff] %vm82, %v81
  %v84 = vmax.f32 %v68, 1e-12
  %v85 = vrsqrt.pop %v84
  %v86 = vmul.f32 %v85, %v84
  %v87 = vmul.f32 %v86, %v85
  %v88 = vmul.f32 0.5, %v87
  %v89 = vsub.f32 1.5, %v88
  %v90 = vmul.f32 %v85, %v89
  %v91 = vmul.f32 %v84, %v90
  %vm92 = vcmp.eq.f32.partialorder %v84, inf
  %v93 = vsel %vm92, %v84, %v91
  %vm94 = vcmp.eq.f32.partialorder %v84, 0.0
  %v95 = vand.u32 %v84, 2147483648
  %v96 = vsel %vm94, %v95, %v93
  %98 = vrot.lane.b32.xlu0 %v96, 1
  %v99 = vpop.permute.xlu0 %98
  %vm101 = vcmask 15368
  %102 = vst.msk [vmem:[%s5] sm:$0xff] %vm101, %v99
  // Predicated region
  $region22: #{tpu_custom_call.1} parent=0 // pred_check
    _
  $region23: #{tpu_custom_call.1} parent=0 // pred_check_branch
    %104 = sbr.rel (0) target = $region25
  $region24: #{tpu_custom_call.1} parent=0 // pred_region
    _
  $region25: #{tpu_custom_call.1} parent=0 // pred_fallthru
    _
  // Predicated region
  $region26: #{tpu_custom_call.1} parent=0 // pred_check
    _
  $region27: #{tpu_custom_call.1} parent=0 // pred_check_branch
    %106 = sbr.rel (0) target = $region29
  $region28: #{tpu_custom_call.1} parent=0 // pred_region
    _
  $region29: #{tpu_custom_call.1} parent=0 // pred_fallthru
    _

// kernel: tpu_custom_call.1
$region0: #{tpu_custom_call.1}
  #allocation0 [shape = 'u32[]', space=smem, size = 0x4, offset = 0x4, fixed_abs, tag = 'smem constant byte address 0x4 - core index']
  #allocation1 [shape = 'u32[72,128]{1,0:T(1,128)}', space=vmem, size = 0x9000, scoped, tag = 'internal scratch']
  %s0 = inlined_call_operand.vmem [shape: f32[8,128], index: 0, kind: input, shape index: {}]
  %s1 = inlined_call_operand.vmem [shape: f32[1,8], index: 1, kind: input, shape index: {}]
  %s2 = inlined_call_operand.vmem [shape: f32[8,1], index: 2, kind: input, shape index: {}]
  %s3 = inlined_call_operand.vmem [shape: s32[8,1], index: 3, kind: input, shape index: {}]
  %s4 = inlined_call_operand.vmem [shape: s32[1,8], index: 4, kind: input, shape index: {}]
  %s5 = inlined_call_operand.vmem [shape: f32[8,2], index: 5, kind: output, shape index: {}]
  %s6 = sld [smem:[#allocation0]]
  $region30: #{tpu_custom_call.1} parent=0
    _
  %s8 = ssub.s32 1, %s6
  %s9 = scalar_select 0, %s8, %s6
  // Predicated region
  $region2: #{tpu_custom_call.1} parent=0 // pred_check
    _
  $region3: #{tpu_custom_call.1} parent=0 // pred_check_branch
    %11 = sbr.rel (0) target = $region5
  $region4: #{tpu_custom_call.1} parent=0 // pred_region
    _
  $region5: #{tpu_custom_call.1} parent=0 // pred_fallthru
    _
  // Predicated region
  $region6: #{tpu_custom_call.1} parent=0 // pred_check
    _
  $region7: #{tpu_custom_call.1} parent=0 // pred_check_branch
    %13 = sbr.rel (0) target = $region9
  $region8: #{tpu_custom_call.1} parent=0 // pred_region
    _
  $region9: #{tpu_custom_call.1} parent=0 // pred_fallthru
    _
  // Predicated region
  $region10: #{tpu_custom_call.1} parent=0 // pred_check
    _
  $region11: #{tpu_custom_call.1} parent=0 // pred_check_branch
    %15 = sbr.rel (0) target = $region13
  $region12: #{tpu_custom_call.1} parent=0 // pred_region
    _
  $region13: #{tpu_custom_call.1} parent=0 // pred_fallthru
    _
  // Predicated region
  $region14: #{tpu_custom_call.1} parent=0 // pred_check
    _
  $region15: #{tpu_custom_call.1} parent=0 // pred_check_branch
    %17 = sbr.rel (0) target = $region17
  $region16: #{tpu_custom_call.1} parent=0 // pred_region
    _
  $region17: #{tpu_custom_call.1} parent=0 // pred_fallthru
    _
  // Predicated region
  $region18: #{tpu_custom_call.1} parent=0 // pred_check
    _
  $region19: #{tpu_custom_call.1} parent=0 // pred_check_branch
    %19 = sbr.rel (0) target = $region21
  $region20: #{tpu_custom_call.1} parent=0 // pred_region
    _
  $region21: #{tpu_custom_call.1} parent=0 // pred_fallthru
    _
  %s20 = smul.u32 0, 8
  %s21 = scalar_lea.vmem %s0, %s20
  %v22 = vld [vmem:[%s21] sm:$0xff]
  %v23 = vld [vmem:[%s0] sm:$0xff]
  %24 = vmatpush.xpose.msra.mxu0 0.0
  %25 = vmatpush.xpose.msra.mxu0 0.0
  %26 = vmatpush.xpose.msra.mxu0 0.0
  %27 = vmatpush.xpose.msra.mxu0 0.0
  %28 = vmatpush.xpose.msra.mxu0 0.0
  %29 = vmatpush.xpose.msra.mxu0 0.0
  %30 = vmatpush.xpose.msra.mxu0 0.0
  %31 = vmatpush.xpose.msra.mxu0 0.0
  %32 = vmatpush.xpose.msra.mxu0 0.0
  %33 = vmatpush.xpose.msra.mxu0 0.0
  %34 = vmatpush.xpose.msra.mxu0 0.0
  %35 = vmatpush.xpose.msra.mxu0 0.0
  %36 = vmatpush.xpose.msra.mxu0 0.0
  %37 = vmatpush.xpose.msra.mxu0 0.0
  %38 = vmatpush.xpose.msra.mxu0 0.0
  %39 = vmatpush.xpose.msra.mxu0 %v23
  %40 = vmatmul.f32.gmra.mxu0 %v22
  %v41 = vpop.f32.mrf.mxu0
  %v42 = vadd.f32 0.0, %v41
  %43 = vdwg.mxu0
  %v44 = vld [vmem:[%s1] sm:$0x1]
  %v45 = vmul.f32 %v42, 2.0
  %v47 = vperm.slane %v44, 0
  %v49 = vsub.f32 %v47, %v45
  %v50 = vld [vmem:[%s3] sm:$0xff]
  %v51 = vld [vmem:[%s4] sm:$0x1]
  %52 = vset.pattern.permute.xlu0 0
  %53 = vperm.xlu0 %52, %v50
  %v54 = vpop.permute.xlu0 %53
  %v55 = vperm.slane %v51, 0
  %vm56 = vcmp.eq.s32.totalorder %v54, %v55
  %v57 = vsel %vm56, %v49, -1e+30
  %v58 = vsel %vm56, 1e+30, %v49
  %v59 = vld [vmem:[%s2] sm:$0xff]
  %vm60 = vcmask 64512
  %v61 = vsel %vm60, %v57, -inf
  %62 = vmax.xlane.f32.xlu0 %v61
  %v63 = vpop.xlane.xlu0 %62
  %v64 = vadd.f32 %v59, %v63
  %v65 = vsel %vm60, %v58, inf
  %66 = vmin.xlane.f32.xlu0 %v65
  %v67 = vpop.xlane.xlu0 %66
  %v68 = vadd.f32 %v59, %v67
  %v69 = vmax.f32 %v64, 1e-12
  %v70 = vrsqrt.pop %v69
  %v71 = vmul.f32 %v70, %v69
  %v72 = vmul.f32 %v71, %v70
  %v73 = vmul.f32 0.5, %v72
  %v74 = vsub.f32 1.5, %v73
  %v75 = vmul.f32 %v70, %v74
  %v76 = vmul.f32 %v69, %v75
  %vm77 = vcmp.eq.f32.partialorder %v69, inf
  %v78 = vsel %vm77, %v69, %v76
  %vm79 = vcmp.eq.f32.partialorder %v69, 0.0
  %v80 = vand.u32 %v69, 2147483648
  %v81 = vsel %vm79, %v80, %v78
  %vm82 = vcmask 7168
  %83 = vst.msk [vmem:[%s5] sm:$0xff] %vm82, %v81
  %v84 = vmax.f32 %v68, 1e-12
  %v85 = vrsqrt.pop %v84
  %v86 = vmul.f32 %v85, %v84
  %v87 = vmul.f32 %v86, %v85
  %v88 = vmul.f32 0.5, %v87
  %v89 = vsub.f32 1.5, %v88
  %v90 = vmul.f32 %v85, %v89
  %v91 = vmul.f32 %v84, %v90
  %vm92 = vcmp.eq.f32.partialorder %v84, inf
  %v93 = vsel %vm92, %v84, %v91
  %vm94 = vcmp.eq.f32.partialorder %v84, 0.0
  %v95 = vand.u32 %v84, 2147483648
  %v96 = vsel %vm94, %v95, %v93
  %98 = vrot.lane.b32.xlu0 %v96, 1
  %v99 = vpop.permute.xlu0 %98
  %vm101 = vcmask 15368
  %102 = vst.msk [vmem:[%s5] sm:$0xff] %vm101, %v99
  // Predicated region
  $region22: #{tpu_custom_call.1} parent=0 // pred_check
    _
  $region23: #{tpu_custom_call.1} parent=0 // pred_check_branch
    %104 = sbr.rel (0) target = $region25
  $region24: #{tpu_custom_call.1} parent=0 // pred_region
    _
  $region25: #{tpu_custom_call.1} parent=0 // pred_fallthru
    _
  // Predicated region
  $region26: #{tpu_custom_call.1} parent=0 // pred_check
    _
  $region27: #{tpu_custom_call.1} parent=0 // pred_check_branch
    %106 = sbr.rel (0) target = $region29
  $region28: #{tpu_custom_call.1} parent=0 // pred_region
    _
  $region29: #{tpu_custom_call.1} parent=0 // pred_fallthru
    _

</llo_original>
